<compile_context>
chip_gen: v6e
topology: v6e:2x2x1
jax: 0.10.0
libtpu: 0.0.40
codegen_flags: <defaults>
</compile_context>

<pallas_src>
import jax
import jax.numpy as jnp
from jax import lax
from jax.experimental import pallas as pl
from jax.experimental.pallas import tpu as pltpu

# static loss-combination weights from the module's __init__ (baked into kernel)
CATEGORY_WEIGHT = 1.0
CATEGORY_TYPE_WEIGHT = 0.5
ATTRIBUTE_WEIGHT = 0.3
COMPATIBILITY_WEIGHT = 0.2
AUX_WEIGHT = 0.3
TOTAL_EPOCHS = 30


# ---------------- in-kernel loss helpers (traced inside the kernel body) ----

def _ce(logits, labels):
    """Mean cross-entropy.  logits: (B, C) f32, labels: (B, 1) i32 -> scalar.

    NOTE: no ignore_index / out-of-range handling (matches nn.CrossEntropyLoss
    defaults with valid labels)."""
    m = jnp.max(logits, axis=-1, keepdims=True)
    shifted = logits - m                                              # (B,C)
    lse = jnp.log(jnp.sum(jnp.exp(shifted), axis=-1, keepdims=True))  # (B,1)
    idx = lax.broadcasted_iota(jnp.int32, logits.shape, 1)            # (B,C)
    picked = jnp.sum(jnp.where(idx == labels, shifted, 0.0),
                     axis=-1, keepdims=True)                          # (B,1)
    # lse - picked == logsumexp(logits) - logits[label]  (max-shift cancels)
    return jnp.sum(lse - picked) * (1.0 / logits.shape[0])


def _bce(x, t):
    """Mean BCEWithLogits.  x, t: (B, A) f32 -> scalar."""
    elems = jnp.maximum(x, 0.0) - x * t + jnp.log(1.0 + jnp.exp(-jnp.abs(x)))
    return jnp.sum(elems) * (1.0 / x.size)


# ---------------- Pallas kernel ---------------------------------------------

def _loss_kernel(epoch_ref,
                 cat_logits_ref, img_aux_logits_ref, cat_labels_ref,
                 type_logits_ref, hm_aux_logits_ref, type_labels_ref,
                 attr_preds_ref, attr_aux_ref, attr_tgts_ref,
                 comp_score_ref, comp_tgts_ref,
                 out_ref):
    cat_labels = cat_labels_ref[...]
    type_labels = type_labels_ref[...]
    attr_tgts = attr_tgts_ref[...]

    category_loss = _ce(cat_logits_ref[...], cat_labels)
    image_aux_loss = _ce(img_aux_logits_ref[...], cat_labels)
    category_type_loss = _ce(type_logits_ref[...], type_labels)
    heatmap_aux_loss = _ce(hm_aux_logits_ref[...], type_labels)
    attribute_loss = _bce(attr_preds_ref[...], attr_tgts)
    attribute_aux_loss = _bce(attr_aux_ref[...], attr_tgts)

    diff = comp_score_ref[...] - comp_tgts_ref[...]
    compatibility_loss = jnp.sum(diff * diff) * (1.0 / diff.size)

    total_aux_loss = image_aux_loss + heatmap_aux_loss + attribute_aux_loss

    # epoch scaling computed in-kernel from an SMEM f32 scalar (trace-safe).
    scaling = jnp.maximum(0.1, 1.0 - epoch_ref[0] * (1.0 / TOTAL_EPOCHS))
    aux_w = AUX_WEIGHT * scaling

    total_loss = (CATEGORY_WEIGHT * category_loss
                  + CATEGORY_TYPE_WEIGHT * category_type_loss
                  + ATTRIBUTE_WEIGHT * attribute_loss
                  + COMPATIBILITY_WEIGHT * compatibility_loss
                  + aux_w * total_aux_loss)

    out_ref[0] = total_loss
    out_ref[1] = category_loss
    out_ref[2] = category_type_loss
    out_ref[3] = attribute_loss
    out_ref[4] = compatibility_loss
    out_ref[5] = image_aux_loss
    out_ref[6] = heatmap_aux_loss
    out_ref[7] = attribute_aux_loss
    out_ref[8] = total_aux_loss


# ---------------- wrapper (glue, fully jit-traceable) ------------------------

def fashion_multi_task_loss(outputs, targets, epoch):
    f32 = jnp.float32
    epoch_arr = jnp.asarray(epoch, f32).reshape(1)

    cat_logits = jnp.asarray(outputs['category_logits'], f32)
    img_aux_logits = jnp.asarray(outputs['image_aux_logits'], f32)
    type_logits = jnp.asarray(outputs['category_type_logits'], f32)
    hm_aux_logits = jnp.asarray(outputs['heatmap_aux_logits'], f32)
    attr_preds = jnp.asarray(outputs['attribute_preds'], f32)
    attr_aux = jnp.asarray(outputs['attribute_aux_logits'], f32)
    comp_score = jnp.asarray(outputs['compatibility_score'], f32).reshape(-1, 1)

    cat_labels = jnp.asarray(targets['category_labels'], jnp.int32).reshape(-1, 1)
    type_labels = jnp.asarray(targets['category_type_labels'], jnp.int32).reshape(-1, 1)
    attr_tgts = jnp.asarray(targets['attribute_targets'], f32)
    comp_tgts = jnp.asarray(targets['compatibility_targets'], f32).reshape(-1, 1)

    vmem = pl.BlockSpec(memory_space=pltpu.MemorySpace.VMEM)
    smem = pl.BlockSpec(memory_space=pltpu.MemorySpace.SMEM)

    vals = pl.pallas_call(
        _loss_kernel,
        out_shape=jax.ShapeDtypeStruct((9,), jnp.float32),
        in_specs=[smem] + [vmem] * 11,
        out_specs=smem,
    )(epoch_arr,
      cat_logits, img_aux_logits, cat_labels,
      type_logits, hm_aux_logits, type_labels,
      attr_preds, attr_aux, attr_tgts,
      comp_score, comp_tgts)

    total_loss = vals[0]
    # Components stay on-device (0-d arrays sliced from one (9,) result), so
    # there is no host sync here and the whole wrapper can live under jit/grad.
    # TODO(synk): torch returns Python floats via .item(); callers wanting that
    # should do a single jax.device_get(vals) instead of 8 blocking converts.
    loss_dict = {
        'category_loss': vals[1],
        'category_type_loss': vals[2],
        'attribute_loss': vals[3],
        'compatibility_loss': vals[4],
        'image_aux_loss': vals[5],
        'heatmap_aux_loss': vals[6],
        'attribute_aux_loss': vals[7],
        'total_aux_loss': vals[8],
    }
    return total_loss, loss_dict


# ---------------- plain-JAX reference for validation -------------------------

def _reference(outputs, targets, epoch):
    def ce(logits, labels):
        lse = jax.nn.logsumexp(logits, axis=-1)
        picked = jnp.take_along_axis(logits, labels[:, None], axis=-1)[:, 0]
        return jnp.mean(lse - picked)

    def bce(x, t):
        return jnp.mean(jnp.maximum(x, 0.0) - x * t + jnp.log1p(jnp.exp(-jnp.abs(x))))

    cat = ce(outputs['category_logits'], targets['category_labels'])
    cat_t = ce(outputs['category_type_logits'], targets['category_type_labels'])
    attr = bce(outputs['attribute_preds'], targets['attribute_targets'])
    comp = jnp.mean((outputs['compatibility_score'] - targets['compatibility_targets']) ** 2)
    img_aux = ce(outputs['image_aux_logits'], targets['category_labels'])
    hm_aux = ce(outputs['heatmap_aux_logits'], targets['category_type_labels'])
    attr_aux = bce(outputs['attribute_aux_logits'], targets['attribute_targets'])
    aux = img_aux + hm_aux + attr_aux
    sf = max(0.1, 1.0 - epoch / TOTAL_EPOCHS)
    total = (CATEGORY_WEIGHT * cat + CATEGORY_TYPE_WEIGHT * cat_t
             + ATTRIBUTE_WEIGHT * attr + COMPATIBILITY_WEIGHT * comp
             + AUX_WEIGHT * sf * aux)
    comps = {'category_loss': cat, 'category_type_loss': cat_t,
             'attribute_loss': attr, 'compatibility_loss': comp,
             'image_aux_loss': img_aux, 'heatmap_aux_loss': hm_aux,
             'attribute_aux_loss': attr_aux, 'total_aux_loss': aux}
    return total, comps


if __name__ == "__main__":
    key = jax.random.PRNGKey(0)
    B, C1, C2, A = 8, 16, 8, 32
    ks = jax.random.split(key, 12)

    outputs = {
        'category_logits': jax.random.normal(ks[0], (B, C1), jnp.float32),
        'category_type_logits': jax.random.normal(ks[1], (B, C2), jnp.float32),
        'attribute_preds': jax.random.normal(ks[2], (B, A), jnp.float32),
        'compatibility_score': jax.random.normal(ks[3], (B, 1), jnp.float32),
        'image_aux_logits': jax.random.normal(ks[4], (B, C1), jnp.float32),
        'heatmap_aux_logits': jax.random.normal(ks[5], (B, C2), jnp.float32),
        'attribute_aux_logits': jax.random.normal(ks[6], (B, A), jnp.float32),
    }
    targets = {
        'category_labels': jax.random.randint(ks[7], (B,), 0, C1, dtype=jnp.int32),
        'category_type_labels': jax.random.randint(ks[8], (B,), 0, C2, dtype=jnp.int32),
        'attribute_targets': (jax.random.uniform(ks[9], (B, A)) > 0.5).astype(jnp.float32),
        'compatibility_targets': jax.random.uniform(ks[10], (B, 1), dtype=jnp.float32),
    }

    epoch = 5
    total_loss, loss_dict = fashion_multi_task_loss(outputs, targets, epoch)
    jax.block_until_ready(total_loss)

    ref_total, ref_comps = _reference(outputs, targets, epoch)
    assert jnp.allclose(total_loss, ref_total, atol=1e-4, rtol=1e-4), (total_loss, ref_total)
    for name, ref_val in ref_comps.items():
        assert jnp.allclose(loss_dict[name], ref_val, atol=1e-4, rtol=1e-4), (
            name, loss_dict[name], ref_val)

    print("KERNEL_OK")
</pallas_src>

<mosaic_0001>
module attributes {stable_mosaic.version = 11 : i64} {
  func.func @_loss_kernel(%arg0: memref<1xf32, #tpu.memory_space<smem>>, %arg1: memref<8x16xf32, #tpu.memory_space<vmem>>, %arg2: memref<8x16xf32, #tpu.memory_space<vmem>>, %arg3: memref<8x1xi32, #tpu.memory_space<vmem>>, %arg4: memref<8x8xf32, #tpu.memory_space<vmem>>, %arg5: memref<8x8xf32, #tpu.memory_space<vmem>>, %arg6: memref<8x1xi32, #tpu.memory_space<vmem>>, %arg7: memref<8x32xf32, #tpu.memory_space<vmem>>, %arg8: memref<8x32xf32, #tpu.memory_space<vmem>>, %arg9: memref<8x32xf32, #tpu.memory_space<vmem>>, %arg10: memref<8x1xf32, #tpu.memory_space<vmem>>, %arg11: memref<8x1xf32, #tpu.memory_space<vmem>>, %arg12: memref<9xf32, #tpu.memory_space<smem>>) attributes {dimension_semantics = [], scalar_prefetch = 0 : i64, scratch_operands = 0 : i64, tpu.core_type = #tpu.core_type<tc>} {
    %c0 = arith.constant 0 : index
    %c0_0 = arith.constant 0 : index
    %0 = vector.load %arg3[%c0, %c0_0] : memref<8x1xi32, #tpu.memory_space<vmem>>, vector<8x1xi32>
    %c0_1 = arith.constant 0 : index
    %c0_2 = arith.constant 0 : index
    %1 = vector.load %arg6[%c0_1, %c0_2] : memref<8x1xi32, #tpu.memory_space<vmem>>, vector<8x1xi32>
    %c0_3 = arith.constant 0 : index
    %c0_4 = arith.constant 0 : index
    %2 = vector.load %arg9[%c0_3, %c0_4] : memref<8x32xf32, #tpu.memory_space<vmem>>, vector<8x32xf32>
    %c0_5 = arith.constant 0 : index
    %c0_6 = arith.constant 0 : index
    %3 = vector.load %arg1[%c0_5, %c0_6] : memref<8x16xf32, #tpu.memory_space<vmem>>, vector<8x16xf32>
    %cst = arith.constant dense<0xFF800000> : vector<8xf32>
    %4 = vector.multi_reduction <maximumf>, %3, %cst [1] : vector<8x16xf32> to vector<8xf32>
    %5 = vector.shape_cast %4 : vector<8xf32> to vector<8x1xf32>
    %6 = vector.broadcast %5 : vector<8x1xf32> to vector<8x16xf32>
    %7 = arith.subf %3, %6 : vector<8x16xf32>
    %8 = math.exp %7 : vector<8x16xf32>
    %cst_7 = arith.constant dense<0.000000e+00> : vector<8xf32>
    %9 = vector.multi_reduction <add>, %8, %cst_7 [1] : vector<8x16xf32> to vector<8xf32>
    %10 = vector.shape_cast %9 : vector<8xf32> to vector<8x1xf32>
    %11 = math.log %10 : vector<8x1xf32>
    %12 = tpu.iota {dimensions = array<i32: 1>} : vector<8x16xi32>
    %13 = vector.broadcast %0 : vector<8x1xi32> to vector<8x16xi32>
    %14 = arith.cmpi eq, %12, %13 : vector<8x16xi32>
    %cst_8 = arith.constant 0.000000e+00 : f32
    %15 = vector.broadcast %cst_8 : f32 to vector<8x16xf32>
    %16 = arith.select %14, %7, %15 : vector<8x16xi1>, vector<8x16xf32>
    %cst_9 = arith.constant dense<0.000000e+00> : vector<8xf32>
    %17 = vector.multi_reduction <add>, %16, %cst_9 [1] : vector<8x16xf32> to vector<8xf32>
    %18 = vector.shape_cast %17 : vector<8xf32> to vector<8x1xf32>
    %19 = arith.subf %11, %18 : vector<8x1xf32>
    %20 = vector.shape_cast %19 : vector<8x1xf32> to vector<1x8x1xf32>
    %cst_10 = arith.constant dense<0.000000e+00> : vector<1xf32>
    %21 = vector.multi_reduction <add>, %20, %cst_10 [1, 2] : vector<1x8x1xf32> to vector<1xf32>
    %22 = vector.shape_cast %21 : vector<1xf32> to vector<1x1x1xf32>
    %23 = vector.extract %22[0, 0, 0] : f32 from vector<1x1x1xf32>
    %cst_11 = arith.constant 1.250000e-01 : f32
    %24 = arith.mulf %23, %cst_11 : f32
    %c0_12 = arith.constant 0 : index
    %c0_13 = arith.constant 0 : index
    %25 = vector.load %arg2[%c0_12, %c0_13] : memref<8x16xf32, #tpu.memory_space<vmem>>, vector<8x16xf32>
    %cst_14 = arith.constant dense<0xFF800000> : vector<8xf32>
    %26 = vector.multi_reduction <maximumf>, %25, %cst_14 [1] : vector<8x16xf32> to vector<8xf32>
    %27 = vector.shape_cast %26 : vector<8xf32> to vector<8x1xf32>
    %28 = vector.broadcast %27 : vector<8x1xf32> to vector<8x16xf32>
    %29 = arith.subf %25, %28 : vector<8x16xf32>
    %30 = math.exp %29 : vector<8x16xf32>
    %cst_15 = arith.constant dense<0.000000e+00> : vector<8xf32>
    %31 = vector.multi_reduction <add>, %30, %cst_15 [1] : vector<8x16xf32> to vector<8xf32>
    %32 = vector.shape_cast %31 : vector<8xf32> to vector<8x1xf32>
    %33 = math.log %32 : vector<8x1xf32>
    %34 = tpu.iota {dimensions = array<i32: 1>} : vector<8x16xi32>
    %35 = vector.broadcast %0 : vector<8x1xi32> to vector<8x16xi32>
    %36 = arith.cmpi eq, %34, %35 : vector<8x16xi32>
    %cst_16 = arith.constant 0.000000e+00 : f32
    %37 = vector.broadcast %cst_16 : f32 to vector<8x16xf32>
    %38 = arith.select %36, %29, %37 : vector<8x16xi1>, vector<8x16xf32>
    %cst_17 = arith.constant dense<0.000000e+00> : vector<8xf32>
    %39 = vector.multi_reduction <add>, %38, %cst_17 [1] : vector<8x16xf32> to vector<8xf32>
    %40 = vector.shape_cast %39 : vector<8xf32> to vector<8x1xf32>
    %41 = arith.subf %33, %40 : vector<8x1xf32>
    %42 = vector.shape_cast %41 : vector<8x1xf32> to vector<1x8x1xf32>
    %cst_18 = arith.constant dense<0.000000e+00> : vector<1xf32>
    %43 = vector.multi_reduction <add>, %42, %cst_18 [1, 2] : vector<1x8x1xf32> to vector<1xf32>
    %44 = vector.shape_cast %43 : vector<1xf32> to vector<1x1x1xf32>
    %45 = vector.extract %44[0, 0, 0] : f32 from vector<1x1x1xf32>
    %cst_19 = arith.constant 1.250000e-01 : f32
    %46 = arith.mulf %45, %cst_19 : f32
    %c0_20 = arith.constant 0 : index
    %c0_21 = arith.constant 0 : index
    %47 = vector.load %arg4[%c0_20, %c0_21] : memref<8x8xf32, #tpu.memory_space<vmem>>, vector<8x8xf32>
    %cst_22 = arith.constant dense<0xFF800000> : vector<8xf32>
    %48 = vector.multi_reduction <maximumf>, %47, %cst_22 [1] : vector<8x8xf32> to vector<8xf32>
    %49 = vector.shape_cast %48 : vector<8xf32> to vector<8x1xf32>
    %50 = vector.broadcast %49 : vector<8x1xf32> to vector<8x8xf32>
    %51 = arith.subf %47, %50 : vector<8x8xf32>
    %52 = math.exp %51 : vector<8x8xf32>
    %cst_23 = arith.constant dense<0.000000e+00> : vector<8xf32>
    %53 = vector.multi_reduction <add>, %52, %cst_23 [1] : vector<8x8xf32> to vector<8xf32>
    %54 = vector.shape_cast %53 : vector<8xf32> to vector<8x1xf32>
    %55 = math.log %54 : vector<8x1xf32>
    %56 = tpu.iota {dimensions = array<i32: 1>} : vector<8x8xi32>
    %57 = vector.broadcast %1 : vector<8x1xi32> to vector<8x8xi32>
    %58 = arith.cmpi eq, %56, %57 : vector<8x8xi32>
    %cst_24 = arith.constant 0.000000e+00 : f32
    %59 = vector.broadcast %cst_24 : f32 to vector<8x8xf32>
    %60 = arith.select %58, %51, %59 : vector<8x8xi1>, vector<8x8xf32>
    %cst_25 = arith.constant dense<0.000000e+00> : vector<8xf32>
    %61 = vector.multi_reduction <add>, %60, %cst_25 [1] : vector<8x8xf32> to vector<8xf32>
    %62 = vector.shape_cast %61 : vector<8xf32> to vector<8x1xf32>
    %63 = arith.subf %55, %62 : vector<8x1xf32>
    %64 = vector.shape_cast %63 : vector<8x1xf32> to vector<1x8x1xf32>
    %cst_26 = arith.constant dense<0.000000e+00> : vector<1xf32>
    %65 = vector.multi_reduction <add>, %64, %cst_26 [1, 2] : vector<1x8x1xf32> to vector<1xf32>
    %66 = vector.shape_cast %65 : vector<1xf32> to vector<1x1x1xf32>
    %67 = vector.extract %66[0, 0, 0] : f32 from vector<1x1x1xf32>
    %cst_27 = arith.constant 1.250000e-01 : f32
    %68 = arith.mulf %67, %cst_27 : f32
    %c0_28 = arith.constant 0 : index
    %c0_29 = arith.constant 0 : index
    %69 = vector.load %arg5[%c0_28, %c0_29] : memref<8x8xf32, #tpu.memory_space<vmem>>, vector<8x8xf32>
    %cst_30 = arith.constant dense<0xFF800000> : vector<8xf32>
    %70 = vector.multi_reduction <maximumf>, %69, %cst_30 [1] : vector<8x8xf32> to vector<8xf32>
    %71 = vector.shape_cast %70 : vector<8xf32> to vector<8x1xf32>
    %72 = vector.broadcast %71 : vector<8x1xf32> to vector<8x8xf32>
    %73 = arith.subf %69, %72 : vector<8x8xf32>
    %74 = math.exp %73 : vector<8x8xf32>
    %cst_31 = arith.constant dense<0.000000e+00> : vector<8xf32>
    %75 = vector.multi_reduction <add>, %74, %cst_31 [1] : vector<8x8xf32> to vector<8xf32>
    %76 = vector.shape_cast %75 : vector<8xf32> to vector<8x1xf32>
    %77 = math.log %76 : vector<8x1xf32>
    %78 = tpu.iota {dimensions = array<i32: 1>} : vector<8x8xi32>
    %79 = vector.broadcast %1 : vector<8x1xi32> to vector<8x8xi32>
    %80 = arith.cmpi eq, %78, %79 : vector<8x8xi32>
    %cst_32 = arith.constant 0.000000e+00 : f32
    %81 = vector.broadcast %cst_32 : f32 to vector<8x8xf32>
    %82 = arith.select %80, %73, %81 : vector<8x8xi1>, vector<8x8xf32>
    %cst_33 = arith.constant dense<0.000000e+00> : vector<8xf32>
    %83 = vector.multi_reduction <add>, %82, %cst_33 [1] : vector<8x8xf32> to vector<8xf32>
    %84 = vector.shape_cast %83 : vector<8xf32> to vector<8x1xf32>
    %85 = arith.subf %77, %84 : vector<8x1xf32>
    %86 = vector.shape_cast %85 : vector<8x1xf32> to vector<1x8x1xf32>
    %cst_34 = arith.constant dense<0.000000e+00> : vector<1xf32>
    %87 = vector.multi_reduction <add>, %86, %cst_34 [1, 2] : vector<1x8x1xf32> to vector<1xf32>
    %88 = vector.shape_cast %87 : vector<1xf32> to vector<1x1x1xf32>
    %89 = vector.extract %88[0, 0, 0] : f32 from vector<1x1x1xf32>
    %cst_35 = arith.constant 1.250000e-01 : f32
    %90 = arith.mulf %89, %cst_35 : f32
    %c0_36 = arith.constant 0 : index
    %c0_37 = arith.constant 0 : index
    %91 = vector.load %arg7[%c0_36, %c0_37] : memref<8x32xf32, #tpu.memory_space<vmem>>, vector<8x32xf32>
    %cst_38 = arith.constant 0.000000e+00 : f32
    %92 = vector.broadcast %cst_38 : f32 to vector<8x32xf32>
    %93 = arith.maximumf %91, %92 : vector<8x32xf32>
    %94 = arith.mulf %91, %2 : vector<8x32xf32>
    %95 = arith.subf %93, %94 : vector<8x32xf32>
    %96 = math.absf %91 : vector<8x32xf32>
    %cst_39 = arith.constant 0.000000e+00 : f32
    %97 = vector.broadcast %cst_39 : f32 to vector<8x32xf32>
    %98 = arith.subf %97, %96 : vector<8x32xf32>
    %99 = math.exp %98 : vector<8x32xf32>
    %cst_40 = arith.constant 1.000000e+00 : f32
    %100 = vector.broadcast %cst_40 : f32 to vector<8x32xf32>
    %101 = arith.addf %100, %99 : vector<8x32xf32>
    %102 = math.log %101 : vector<8x32xf32>
    %103 = arith.addf %95, %102 : vector<8x32xf32>
    %104 = vector.shape_cast %103 : vector<8x32xf32> to vector<1x8x32xf32>
    %cst_41 = arith.constant dense<0.000000e+00> : vector<1xf32>
    %105 = vector.multi_reduction <add>, %104, %cst_41 [1, 2] : vector<1x8x32xf32> to vector<1xf32>
    %106 = vector.shape_cast %105 : vector<1xf32> to vector<1x1x1xf32>
    %107 = vector.extract %106[0, 0, 0] : f32 from vector<1x1x1xf32>
    %cst_42 = arith.constant 3.906250e-03 : f32
    %108 = arith.mulf %107, %cst_42 : f32
    %c0_43 = arith.constant 0 : index
    %c0_44 = arith.constant 0 : index
    %109 = vector.load %arg8[%c0_43, %c0_44] : memref<8x32xf32, #tpu.memory_space<vmem>>, vector<8x32xf32>
    %cst_45 = arith.constant 0.000000e+00 : f32
    %110 = vector.broadcast %cst_45 : f32 to vector<8x32xf32>
    %111 = arith.maximumf %109, %110 : vector<8x32xf32>
    %112 = arith.mulf %109, %2 : vector<8x32xf32>
    %113 = arith.subf %111, %112 : vector<8x32xf32>
    %114 = math.absf %109 : vector<8x32xf32>
    %cst_46 = arith.constant 0.000000e+00 : f32
    %115 = vector.broadcast %cst_46 : f32 to vector<8x32xf32>
    %116 = arith.subf %115, %114 : vector<8x32xf32>
    %117 = math.exp %116 : vector<8x32xf32>
    %cst_47 = arith.constant 1.000000e+00 : f32
    %118 = vector.broadcast %cst_47 : f32 to vector<8x32xf32>
    %119 = arith.addf %118, %117 : vector<8x32xf32>
    %120 = math.log %119 : vector<8x32xf32>
    %121 = arith.addf %113, %120 : vector<8x32xf32>
    %122 = vector.shape_cast %121 : vector<8x32xf32> to vector<1x8x32xf32>
    %cst_48 = arith.constant dense<0.000000e+00> : vector<1xf32>
    %123 = vector.multi_reduction <add>, %122, %cst_48 [1, 2] : vector<1x8x32xf32> to vector<1xf32>
    %124 = vector.shape_cast %123 : vector<1xf32> to vector<1x1x1xf32>
    %125 = vector.extract %124[0, 0, 0] : f32 from vector<1x1x1xf32>
    %cst_49 = arith.constant 3.906250e-03 : f32
    %126 = arith.mulf %125, %cst_49 : f32
    %c0_50 = arith.constant 0 : index
    %c0_51 = arith.constant 0 : index
    %127 = vector.load %arg10[%c0_50, %c0_51] : memref<8x1xf32, #tpu.memory_space<vmem>>, vector<8x1xf32>
    %c0_52 = arith.constant 0 : index
    %c0_53 = arith.constant 0 : index
    %128 = vector.load %arg11[%c0_52, %c0_53] : memref<8x1xf32, #tpu.memory_space<vmem>>, vector<8x1xf32>
    %129 = arith.subf %127, %128 : vector<8x1xf32>
    %130 = arith.mulf %129, %129 : vector<8x1xf32>
    %131 = vector.shape_cast %130 : vector<8x1xf32> to vector<1x8x1xf32>
    %cst_54 = arith.constant dense<0.000000e+00> : vector<1xf32>
    %132 = vector.multi_reduction <add>, %131, %cst_54 [1, 2] : vector<1x8x1xf32> to vector<1xf32>
    %133 = vector.shape_cast %132 : vector<1xf32> to vector<1x1x1xf32>
    %134 = vector.extract %133[0, 0, 0] : f32 from vector<1x1x1xf32>
    %cst_55 = arith.constant 1.250000e-01 : f32
    %135 = arith.mulf %134, %cst_55 : f32
    %136 = arith.addf %46, %90 : f32
    %137 = arith.addf %136, %126 : f32
    %c0_56 = arith.constant 0 : index
    %138 = memref.load %arg0[%c0_56] : memref<1xf32, #tpu.memory_space<smem>>
    %cst_57 = arith.constant 0.0333333351 : f32
    %139 = arith.mulf %138, %cst_57 : f32
    %cst_58 = arith.constant 1.000000e+00 : f32
    %140 = arith.subf %cst_58, %139 : f32
    %cst_59 = arith.constant 1.000000e-01 : f32
    %141 = arith.maximumf %cst_59, %140 : f32
    %cst_60 = arith.constant 3.000000e-01 : f32
    %142 = arith.mulf %cst_60, %141 : f32
    %cst_61 = arith.constant 1.000000e+00 : f32
    %143 = arith.mulf %cst_61, %24 : f32
    %cst_62 = arith.constant 5.000000e-01 : f32
    %144 = arith.mulf %cst_62, %68 : f32
    %145 = arith.addf %143, %144 : f32
    %cst_63 = arith.constant 3.000000e-01 : f32
    %146 = arith.mulf %cst_63, %108 : f32
    %147 = arith.addf %145, %146 : f32
    %cst_64 = arith.constant 2.000000e-01 : f32
    %148 = arith.mulf %cst_64, %135 : f32
    %149 = arith.addf %147, %148 : f32
    %150 = arith.mulf %142, %137 : f32
    %151 = arith.addf %149, %150 : f32
    %c0_65 = arith.constant 0 : index
    %152 = memref.load %arg12[%c0_65] : memref<9xf32, #tpu.memory_space<smem>>
    memref.store %151, %arg12[%c0_65] : memref<9xf32, #tpu.memory_space<smem>>
    %c1 = arith.constant 1 : index
    %153 = memref.load %arg12[%c1] : memref<9xf32, #tpu.memory_space<smem>>
    memref.store %24, %arg12[%c1] : memref<9xf32, #tpu.memory_space<smem>>
    %c2 = arith.constant 2 : index
    %154 = memref.load %arg12[%c2] : memref<9xf32, #tpu.memory_space<smem>>
    memref.store %68, %arg12[%c2] : memref<9xf32, #tpu.memory_space<smem>>
    %c3 = arith.constant 3 : index
    %155 = memref.load %arg12[%c3] : memref<9xf32, #tpu.memory_space<smem>>
    memref.store %108, %arg12[%c3] : memref<9xf32, #tpu.memory_space<smem>>
    %c4 = arith.constant 4 : index
    %156 = memref.load %arg12[%c4] : memref<9xf32, #tpu.memory_space<smem>>
    memref.store %135, %arg12[%c4] : memref<9xf32, #tpu.memory_space<smem>>
    %c5 = arith.constant 5 : index
    %157 = memref.load %arg12[%c5] : memref<9xf32, #tpu.memory_space<smem>>
    memref.store %46, %arg12[%c5] : memref<9xf32, #tpu.memory_space<smem>>
    %c6 = arith.constant 6 : index
    %158 = memref.load %arg12[%c6] : memref<9xf32, #tpu.memory_space<smem>>
    memref.store %90, %arg12[%c6] : memref<9xf32, #tpu.memory_space<smem>>
    %c7 = arith.constant 7 : index
    %159 = memref.load %arg12[%c7] : memref<9xf32, #tpu.memory_space<smem>>
    memref.store %126, %arg12[%c7] : memref<9xf32, #tpu.memory_space<smem>>
    %c8 = arith.constant 8 : index
    %160 = memref.load %arg12[%c8] : memref<9xf32, #tpu.memory_space<smem>>
    memref.store %137, %arg12[%c8] : memref<9xf32, #tpu.memory_space<smem>>
    return
  }
}

</mosaic_0001>

<llo_original>
// kernel: tpu_custom_call.1
$region0: #{tpu_custom_call.1}
  #allocation0 [shape = 'u32[]', space=smem, size = 0x4, offset = 0x4, fixed_abs, tag = 'smem constant byte address 0x4 - core index']
  #allocation1 [shape = 'u32[144,128]{1,0:T(1,128)}', space=vmem, size = 0x12000, scoped, tag = 'internal scratch']
  #allocation2 [shape = 'f32[1]{0:T(128)S(6)}', space=smem, size = 0x200, scoped, tag = 'scoped memory for tpu_custom_call.1']
  %s0 = inlined_call_operand.<no memory space> [shape: f32[1], index: 0, kind: input, shape index: {}]
  %s1 = inlined_call_operand.vmem [shape: f32[8,16], index: 1, kind: input, shape index: {}]
  %s2 = inlined_call_operand.vmem [shape: f32[8,16], index: 2, kind: input, shape index: {}]
  %s3 = inlined_call_operand.vmem [shape: s32[8,1], index: 3, kind: input, shape index: {}]
  %s4 = inlined_call_operand.vmem [shape: f32[8,8], index: 4, kind: input, shape index: {}]
  %s5 = inlined_call_operand.vmem [shape: f32[8,8], index: 5, kind: input, shape index: {}]
  %s6 = inlined_call_operand.vmem [shape: s32[8,1], index: 6, kind: input, shape index: {}]
  %s7 = inlined_call_operand.vmem [shape: f32[8,32], index: 7, kind: input, shape index: {}]
  %s8 = inlined_call_operand.vmem [shape: f32[8,32], index: 8, kind: input, shape index: {}]
  %s9 = inlined_call_operand.hbm [shape: f32[8,32], index: 9, kind: input, shape index: {}]
  %s10 = inlined_call_operand.vmem [shape: f32[8,1], index: 10, kind: input, shape index: {}]
  %s11 = inlined_call_operand.vmem [shape: f32[8,1], index: 11, kind: input, shape index: {}]
  %s12 = inlined_call_operand.hbm [shape: f32[9], index: 12, kind: output, shape index: {}]
  %s13 = sld [smem:[#allocation0]]
  $region62: #{tpu_custom_call.1} parent=0
    _
  %s15 = ssub.s32 1, %s13
  %s16 = scalar_select 0, %s15, %s13
  %17 = sst [smem:[#allocation2]] %s0
  $region1: #{tpu_custom_call.1} parent=0
    #allocation3 [shape = 'u8[4096]{0}', space=vmem, size = 0x1000, scoped, tag = 'input window, operand 9, single buffered']
    #allocation4 [shape = 's32[1]{0}', space=sflag, size = 0x4, scoped, tag = 'scoped memory for tpu_custom_call.1']
    #allocation5 [shape = 's32[1]{0}', space=sflag, size = 0x4, scoped, tag = 'scoped memory for tpu_custom_call.1']
    #allocation6 [shape = 'u8[512]{0}', space=smem, size = 0x200, scoped, tag = 'output window, operand 0, single buffered']
    %18 = vsyncpa [#allocation4], 0
    %19 = vsyncpa [#allocation5], 0
    // Predicated region
    $region2: #{tpu_custom_call.1} parent=1 // pred_check
      _
    $region3: #{tpu_custom_call.1} parent=1 // pred_check_branch
      %21 = sbr.rel (0) target = $region5
    $region4: #{tpu_custom_call.1} parent=1 // pred_region
      _
    $region5: #{tpu_custom_call.1} parent=1 // pred_fallthru
      _
    // Predicated region
    $region6: #{tpu_custom_call.1} parent=1 // pred_check
      _
    $region7: #{tpu_custom_call.1} parent=1 // pred_check_branch
      %23 = sbr.rel (0) target = $region9
    $region8: #{tpu_custom_call.1} parent=1 // pred_region
      _
    $region9: #{tpu_custom_call.1} parent=1 // pred_fallthru
      _
    // Predicated region
    $region10: #{tpu_custom_call.1} parent=1 // pred_check
      _
    $region11: #{tpu_custom_call.1} parent=1 // pred_check_branch
      %25 = sbr.rel (0) target = $region13
    $region12: #{tpu_custom_call.1} parent=1 // pred_region
      _
    $region13: #{tpu_custom_call.1} parent=1 // pred_fallthru
      _
    // Predicated region
    $region14: #{tpu_custom_call.1} parent=1 // pred_check
      _
    $region15: #{tpu_custom_call.1} parent=1 // pred_check_branch
      %27 = sbr.rel (0) target = $region17
    $region16: #{tpu_custom_call.1} parent=1 // pred_region
      _
    $region17: #{tpu_custom_call.1} parent=1 // pred_fallthru
      _
    // Predicated region
    $region18: #{tpu_custom_call.1} parent=1 // pred_check
      _
    $region19: #{tpu_custom_call.1} parent=1 // pred_check_branch
      %29 = sbr.rel (0) target = $region21
    $region20: #{tpu_custom_call.1} parent=1 // pred_region
      _
    $region21: #{tpu_custom_call.1} parent=1 // pred_fallthru
      _
    // Predicated region
    $region22: #{tpu_custom_call.1} parent=1 // pred_check
      _
    $region23: #{tpu_custom_call.1} parent=1 // pred_check_branch
      %31 = sbr.rel (0) target = $region25
    $region24: #{tpu_custom_call.1} parent=1 // pred_region
      _
    $region25: #{tpu_custom_call.1} parent=1 // pred_fallthru
      _
    // Predicated region
    $region26: #{tpu_custom_call.1} parent=1 // pred_check
      _
    $region27: #{tpu_custom_call.1} parent=1 // pred_check_branch
      %33 = sbr.rel (0) target = $region29
    $region28: #{tpu_custom_call.1} parent=1 // pred_region
      _
    $region29: #{tpu_custom_call.1} parent=1 // pred_fallthru
      _
    // Predicated region
    $region30: #{tpu_custom_call.1} parent=1 // pred_check
      _
    $region31: #{tpu_custom_call.1} parent=1 // pred_check_branch
      %35 = sbr.rel (0) target = $region33
    $region32: #{tpu_custom_call.1} parent=1 // pred_region
      _
    $region33: #{tpu_custom_call.1} parent=1 // pred_fallthru
      _
    // Predicated region
    $region34: #{tpu_custom_call.1} parent=1 // pred_check
      _
    $region35: #{tpu_custom_call.1} parent=1 // pred_check_branch
      %37 = sbr.rel (0) target = $region37
    $region36: #{tpu_custom_call.1} parent=1 // pred_region
      _
    $region37: #{tpu_custom_call.1} parent=1 // pred_fallthru
      _
    // Predicated region
    $region38: #{tpu_custom_call.1} parent=1 // pred_check
      _
    $region39: #{tpu_custom_call.1} parent=1 // pred_check_branch
      %39 = sbr.rel (0) target = $region41
    $region40: #{tpu_custom_call.1} parent=1 // pred_region
      %s41 = ssub.s32 128, 128
      %42 = vsyncadd [#allocation4], %s41
      %s44 = sshll.u32 [#allocation3], 4
      %s45 = int_to_ptr.vmem [resolvable:$true] %s44
      %47 = dma.hbm_to_vmem [thread:$0]  %s9, 128, %s45, [#allocation4]
    $region41: #{tpu_custom_call.1} parent=1 // pred_fallthru
      _
    // Predicated region
    $region42: #{tpu_custom_call.1} parent=1 // pred_check
      _
    $region43: #{tpu_custom_call.1} parent=1 // pred_check_branch
      %49 = sbr.rel (0) target = $region45
    $region44: #{tpu_custom_call.1} parent=1 // pred_region
      _
    $region45: #{tpu_custom_call.1} parent=1 // pred_fallthru
      _
    // Predicated region
    $region46: #{tpu_custom_call.1} parent=1 // pred_check
      _
    $region47: #{tpu_custom_call.1} parent=1 // pred_check_branch
      %51 = sbr.rel (0) target = $region49
    $region48: #{tpu_custom_call.1} parent=1 // pred_region
      _
    $region49: #{tpu_custom_call.1} parent=1 // pred_fallthru
      _
    // Predicated region
    $region50: #{tpu_custom_call.1} parent=1 // pred_check
      _
    $region51: #{tpu_custom_call.1} parent=1 // pred_check_branch
      %53 = sbr.rel (0) target = $region53
    $region52: #{tpu_custom_call.1} parent=1 // pred_region
      %54 = dma.done [#allocation4], 128
    $region53: #{tpu_custom_call.1} parent=1 // pred_fallthru
      _
    %v55 = vld [vmem:[%s3] sm:$0xff]
    %v56 = vld [vmem:[%s6] sm:$0xff]
    %v57 = vld [vmem:[#allocation3] sm:$0xff]
    %v58 = vld [vmem:[%s1] sm:$0xff]
    %vm59 = vcmask 130048
    %v60 = vsel %vm59, %v58, -inf
    %61 = vmax.xlane.f32.xlu0 %v60
    %v62 = vpop.xlane.xlu0 %61
    %v63 = vsub.f32 %v58, %v62
    %v64 = vmul.f32 %v63, 1.442695
    %v65 = vpow.pop %v64
    %v66 = vsel %vm59, %v65, 0.0
    %67 = vadd.xlane.f32.xlu0 %v66
    %v68 = vpop.xlane.xlu0 %67
    %v69 = vlog2.pop %v68
    %v70 = vmul.f32 %v69, 0.6931472
    %v71 = vlaneseq
    %v72 = vand.u32 %v71, 127
    %73 = vset.pattern.permute.xlu0 0
    %74 = vperm.xlu0 %73, %v55
    %v75 = vpop.permute.xlu0 %74
    %vm76 = vcmp.eq.s32.totalorder %v72, %v75
    %v77 = vsel %vm76, %v63, 0.0
    %v78 = vsel %vm59, %v77, 0.0
    %79 = vadd.xlane.f32.xlu0 %v78
    %v80 = vpop.xlane.xlu0 %79
    %v81 = vsub.f32 %v70, %v80
    %vm82 = vcmask 7168
    %v83 = vsel %vm82, %v81, 0.0
    %84 = vadd.xlane.f32.xlu0 %v83
    %v85 = vpop.xlane.xlu0 %84
    %v86 = vrot.slane %v85, 4
    %v87 = vadd.f32 %v85, %v86
    %v88 = vrot.slane %v87, 2
    %v89 = vadd.f32 %v87, %v88
    %v90 = vrot.slane %v89, 1
    %v91 = vadd.f32 %v89, %v90
    %s92 = vtos %v91
    %s93 = smul.f32 %s92, 0.125
    %v94 = vld [vmem:[%s2] sm:$0xff]
    %v95 = vsel %vm59, %v94, -inf
    %96 = vmax.xlane.f32.xlu0 %v95
    %v97 = vpop.xlane.xlu0 %96
    %v98 = vsub.f32 %v94, %v97
    %v99 = vmul.f32 %v98, 1.442695
    %v100 = vpow.pop %v99
    %v101 = vsel %vm59, %v100, 0.0
    %102 = vadd.xlane.f32.xlu0 %v101
    %v103 = vpop.xlane.xlu0 %102
    %v104 = vlog2.pop %v103
    %v105 = vmul.f32 %v104, 0.6931472
    %v106 = vsel %vm76, %v98, 0.0
    %v107 = vsel %vm59, %v106, 0.0
    %108 = vadd.xlane.f32.xlu0 %v107
    %v109 = vpop.xlane.xlu0 %108
    %v110 = vsub.f32 %v105, %v109
    %v111 = vsel %vm82, %v110, 0.0
    %112 = vadd.xlane.f32.xlu0 %v111
    %v113 = vpop.xlane.xlu0 %112
    %v114 = vrot.slane %v113, 4
    %v115 = vadd.f32 %v113, %v114
    %v116 = vrot.slane %v115, 2
    %v117 = vadd.f32 %v115, %v116
    %v118 = vrot.slane %v117, 1
    %v119 = vadd.f32 %v117, %v118
    %s120 = vtos %v119
    %s121 = smul.f32 %s120, 0.125
    %v122 = vld [vmem:[%s4] sm:$0xff]
    %vm123 = vcmask 64512
    %v124 = vsel %vm123, %v122, -inf
    %125 = vmax.xlane.f32.xlu0 %v124
    %v126 = vpop.xlane.xlu0 %125
    %v127 = vsub.f32 %v122, %v126
    %v128 = vmul.f32 %v127, 1.442695
    %v129 = vpow.pop %v128
    %v130 = vsel %vm123, %v129, 0.0
    %131 = vadd.xlane.f32.xlu0 %v130
    %v132 = vpop.xlane.xlu0 %131
    %v133 = vlog2.pop %v132
    %v134 = vmul.f32 %v133, 0.6931472
    %135 = vset.pattern.permute.xlu0 0
    %136 = vperm.xlu0 %135, %v56
    %v137 = vpop.permute.xlu0 %136
    %vm138 = vcmp.eq.s32.totalorder %v72, %v137
    %v139 = vsel %vm138, %v127, 0.0
    %v140 = vsel %vm123, %v139, 0.0
    %141 = vadd.xlane.f32.xlu0 %v140
    %v142 = vpop.xlane.xlu0 %141
    %v143 = vsub.f32 %v134, %v142
    %v144 = vsel %vm82, %v143, 0.0
    %145 = vadd.xlane.f32.xlu0 %v144
    %v146 = vpop.xlane.xlu0 %145
    %v147 = vrot.slane %v146, 4
    %v148 = vadd.f32 %v146, %v147
    %v149 = vrot.slane %v148, 2
    %v150 = vadd.f32 %v148, %v149
    %v151 = vrot.slane %v150, 1
    %v152 = vadd.f32 %v150, %v151
    %s153 = vtos %v152
    %s154 = smul.f32 %s153, 0.125
    %v155 = vld [vmem:[%s5] sm:$0xff]
    %v156 = vsel %vm123, %v155, -inf
    %157 = vmax.xlane.f32.xlu0 %v156
    %v158 = vpop.xlane.xlu0 %157
    %v159 = vsub.f32 %v155, %v158
    %v160 = vmul.f32 %v159, 1.442695
    %v161 = vpow.pop %v160
    %v162 = vsel %vm123, %v161, 0.0
    %163 = vadd.xlane.f32.xlu0 %v162
    %v164 = vpop.xlane.xlu0 %163
    %v165 = vlog2.pop %v164
    %v166 = vmul.f32 %v165, 0.6931472
    %v167 = vsel %vm138, %v159, 0.0
    %v168 = vsel %vm123, %v167, 0.0
    %169 = vadd.xlane.f32.xlu0 %v168
    %v170 = vpop.xlane.xlu0 %169
    %v171 = vsub.f32 %v166, %v170
    %v172 = vsel %vm82, %v171, 0.0
    %173 = vadd.xlane.f32.xlu0 %v172
    %v174 = vpop.xlane.xlu0 %173
    %v175 = vrot.slane %v174, 4
    %v176 = vadd.f32 %v174, %v175
    %v177 = vrot.slane %v176, 2
    %v178 = vadd.f32 %v176, %v177
    %v179 = vrot.slane %v178, 1
    %v180 = vadd.f32 %v178, %v179
    %s181 = vtos %v180
    %s182 = smul.f32 %s181, 0.125
    %v183 = vld [vmem:[%s7] sm:$0xff]
    %v184 = vmax.f32 %v183, 0.0
    %v185 = vmul.f32 %v183, %v57
    %v186 = vsub.f32 %v184, %v185
    %v187 = vand.u32 2147483647, %v183
    %v188 = vsub.f32 0.0, %v187
    %v189 = vmul.f32 %v188, 1.442695
    %v190 = vpow.pop %v189
    %v191 = vadd.f32 %v190, 1.0
    %v192 = vlog2.pop %v191
    %v193 = vmul.f32 %v192, 0.6931472
    %v194 = vadd.f32 %v186, %v193
    %vm195 = vcmask 261120
    %v196 = vsel %vm195, %v194, 0.0
    %197 = vadd.xlane.f32.xlu0 %v196
    %v198 = vpop.xlane.xlu0 %197
    %v199 = vrot.slane %v198, 4
    %v200 = vadd.f32 %v198, %v199
    %v201 = vrot.slane %v200, 2
    %v202 = vadd.f32 %v200, %v201
    %v203 = vrot.slane %v202, 1
    %v204 = vadd.f32 %v202, %v203
    %s205 = vtos %v204
    %s206 = smul.f32 %s205, 0.00390625
    %v207 = vld [vmem:[%s8] sm:$0xff]
    %v208 = vmax.f32 %v207, 0.0
    %v209 = vmul.f32 %v207, %v57
    %v210 = vsub.f32 %v208, %v209
    %v211 = vand.u32 2147483647, %v207
    %v212 = vsub.f32 0.0, %v211
    %v213 = vmul.f32 %v212, 1.442695
    %v214 = vpow.pop %v213
    %v215 = vadd.f32 %v214, 1.0
    %v216 = vlog2.pop %v215
    %v217 = vmul.f32 %v216, 0.6931472
    %v218 = vadd.f32 %v210, %v217
    %v219 = vsel %vm195, %v218, 0.0
    %220 = vadd.xlane.f32.xlu0 %v219
    %v221 = vpop.xlane.xlu0 %220
    %v222 = vrot.slane %v221, 4
    %v223 = vadd.f32 %v221, %v222
    %v224 = vrot.slane %v223, 2
    %v225 = vadd.f32 %v223, %v224
    %v226 = vrot.slane %v225, 1
    %v227 = vadd.f32 %v225, %v226
    %s228 = vtos %v227
    %s229 = smul.f32 %s228, 0.00390625
    %v230 = vld [vmem:[%s10] sm:$0xff]
    %v231 = vld [vmem:[%s11] sm:$0xff]
    %v232 = vsub.f32 %v230, %v231
    %v233 = vmul.f32 %v232, %v232
    %v234 = vsel %vm82, %v233, 0.0
    %235 = vadd.xlane.f32.xlu0 %v234
    %v236 = vpop.xlane.xlu0 %235
    %v237 = vrot.slane %v236, 4
    %v238 = vadd.f32 %v236, %v237
    %v239 = vrot.slane %v238, 2
    %v240 = vadd.f32 %v238, %v239
    %v241 = vrot.slane %v240, 1
    %v242 = vadd.f32 %v240, %v241
    %s243 = vtos %v242
    %s244 = smul.f32 %s243, 0.125
    %s245 = sadd.f32 %s121, %s182
    %s246 = sadd.f32 %s245, %s229
    %s247 = sld [smem:[#allocation2]]
    %s248 = smul.f32 %s247, 0.033333335
    %s249 = ssub.f32 1.0, %s248
    %s250 = smax.f32 %s249, 0.1
    %s251 = smul.f32 %s250, 0.3
    %s252 = smul.f32 %s154, 0.5
    %s253 = sadd.f32 %s93, %s252
    %s254 = smul.f32 %s206, 0.3
    %s255 = sadd.f32 %s253, %s254
    %s256 = smul.f32 %s244, 0.2
    %s257 = sadd.f32 %s255, %s256
    %s258 = smul.f32 %s251, %s246
    %s259 = sadd.f32 %s257, %s258
    %s260 = scalar_lea.smem [#allocation6], 0
    %261 = sst [smem:[%s260]] %s259
    %s262 = scalar_lea.smem [#allocation6], 1
    %263 = sst [smem:[%s262]] %s93
    %s264 = scalar_lea.smem [#allocation6], 2
    %265 = sst [smem:[%s264]] %s154
    %s266 = scalar_lea.smem [#allocation6], 3
    %267 = sst [smem:[%s266]] %s206
    %s268 = scalar_lea.smem [#allocation6], 4
    %269 = sst [smem:[%s268]] %s244
    %s270 = scalar_lea.smem [#allocation6], 5
    %271 = sst [smem:[%s270]] %s121
    %s272 = scalar_lea.smem [#allocation6], 6
    %273 = sst [smem:[%s272]] %s182
    %s274 = scalar_lea.smem [#allocation6], 7
    %275 = sst [smem:[%s274]] %s229
    %s276 = scalar_lea.smem [#allocation6], 8
    %277 = sst [smem:[%s276]] %s246
    // Predicated region
    $region54: #{tpu_custom_call.1} parent=1 // pred_check
      _
    $region55: #{tpu_custom_call.1} parent=1 // pred_check_branch
      %279 = sbr.rel (0) target = $region57
    $region56: #{tpu_custom_call.1} parent=1 // pred_region
      %s281 = ssub.s32 16, 16
      %282 = vsyncadd [#allocation5], %s281
      %285 = dma.smem_to_hbm [#allocation6], 16, %s12, [#allocation5]
    $region57: #{tpu_custom_call.1} parent=1 // pred_fallthru
      _
    // Predicated region
    $region58: #{tpu_custom_call.1} parent=1 // pred_check
      _
    $region59: #{tpu_custom_call.1} parent=1 // pred_check_branch
      %287 = sbr.rel (0) target = $region61
    $region60: #{tpu_custom_call.1} parent=1 // pred_region
      %288 = dma.done [#allocation5], 16
    $region61: #{tpu_custom_call.1} parent=1 // pred_fallthru
      _
    %289 = sfence
    %290 = vsyncpa [#allocation4], 1
    %291 = vsyncpa [#allocation5], 1

</llo_original>
